<compile_context>
chip_gen: v7x
topology: tpu7x:2x2x1
jax: 0.10.0
libtpu: 0.0.40
codegen_flags: <defaults>
</compile_context>

<pallas_src>
import functools

import jax
import jax.numpy as jnp
from jax.experimental import pallas as pl
from jax.experimental.pallas import tpu as pltpu


_LANES = 128


def _ece_partial_kernel(logits_ref, labels_ref, out_ref, *,
                        n_bins, k0, n_bins_eff, hw_valid):
    """Accumulate per-bin, lane-wide partial sums of (confidence - correct)."""
    s = pl.program_id(1)                      # spatial-tile index (sequential)

    @pl.when(s == 0)
    def _init():
        out_ref[...] = jnp.zeros_like(out_ref)

    x = logits_ref[0]                         # [C, T] f32, samples on lanes
    lbl = labels_ref[0].astype(jnp.float32)   # [1, T]
    c, t = x.shape

    # confidence = max_c softmax(x)_c = 1 / sum_c exp(x_c - max_c x_c)
    m = jnp.max(x, axis=0, keepdims=True)                        # [1, T]
    denom = jnp.sum(jnp.exp(x - m), axis=0, keepdims=True)       # [1, T]
    conf = 1.0 / denom                                           # [1, T]

    # prediction = index of the first maximum (torch.max tie-breaking)
    clsf = jax.lax.broadcasted_iota(jnp.int32, x.shape, 0).astype(jnp.float32)
    pred = jnp.min(jnp.where(x == m, clsf, float(c)), axis=0, keepdims=True)
    acc = (pred == lbl).astype(jnp.float32)                      # [1, T]

    if hw_valid is not None:
        # ragged last tile: force conf = 0 on padded lanes -> bin_idx = -1,
        # which matches no bin, so padded samples contribute nothing.
        lane = jax.lax.broadcasted_iota(jnp.int32, (1, t), 1)
        conf = jnp.where(s * t + lane < hw_valid, conf, 0.0)

    contrib = conf - acc                                         # [1, T]

    # bin k is (k/n_bins, (k+1)/n_bins]  ->  k = ceil(conf * n_bins) - 1
    bin_idx = jnp.ceil(conf * float(n_bins)).astype(jnp.int32) - 1   # [1, T]

    # only bins k0..n_bins-1 can fire (conf >= 1/C prunes the lower ones)
    bins = k0 + jax.lax.broadcasted_iota(jnp.int32, (n_bins_eff, 1), 0)

    # one-hot accumulate column-by-column into a lane-wide register partial;
    # a single read-modify-write of the [n_bins_eff, 128] output per step.
    def column(j):
        lo = j * _LANES
        bj = bin_idx[:, lo:lo + _LANES]                          # [1, 128]
        vj = contrib[:, lo:lo + _LANES]                          # [1, 128]
        return jnp.where(bj == bins, vj, 0.0)                    # [n_bins_eff, 128]

    part = column(0)
    for j in range(1, t // _LANES):
        part = part + column(j)

    out_ref[...] = out_ref[...] + part[None]


def ece_loss(logits, labels, *, n_bins=15, tile_lanes=2048):
    """
    logits : [B, C, H, W] float  (raw logits, NOT softmax scores)
    labels : [B, H, W]    int    class labels
    returns: [1] float32 Expected Calibration Error (same as _ECELoss.forward)
    """
    B, C, H, W = logits.shape
    HW = H * W
    N = B * HW

    # lane tile: multiple of 128, capped at tile_lanes, covering HW (padded)
    T = min(int(tile_lanes), -(-HW // _LANES) * _LANES)
    T = max(_LANES, (T // _LANES) * _LANES)
    n_s = -(-HW // T)
    s_pad = n_s * T

    # free reshapes only — no NCHW<->NHWC transposes; spatial axis on lanes
    logits3 = logits.astype(jnp.float32).reshape(B, C, HW)
    labels3 = labels.astype(jnp.int32).reshape(B, 1, HW)
    if s_pad != HW:
        logits3 = jnp.pad(logits3, ((0, 0), (0, 0), (0, s_pad - HW)))
        labels3 = jnp.pad(labels3, ((0, 0), (0, 0), (0, s_pad - HW)))

    # conf = 1/sum(exp) >= 1/C, so bins whose upper bound < 1/C never fire
    k0 = max(0, -(-n_bins // C) - 1)          # ceil(n_bins / C) - 1
    n_bins_eff = n_bins - k0

    kernel = functools.partial(
        _ece_partial_kernel,
        n_bins=n_bins, k0=k0, n_bins_eff=n_bins_eff,
        hw_valid=(HW if s_pad != HW else None),
    )

    partials = pl.pallas_call(
        kernel,
        out_shape=jax.ShapeDtypeStruct((B, n_bins_eff, _LANES), jnp.float32),
        grid=(B, n_s),
        in_specs=[
            # logits block [1, C, T]: full class dim, lane-dense spatial tile
            pl.BlockSpec((1, C, T), lambda b, s: (b, 0, s)),
            # labels block [1, 1, T]
            pl.BlockSpec((1, 1, T), lambda b, s: (b, 0, s)),
        ],
        # per-batch-row, lane-wide bin accumulator: resident across the
        # sequential spatial axis; each parallel b owns its own block (v7x 2 TC)
        out_specs=pl.BlockSpec((1, n_bins_eff, _LANES), lambda b, s: (b, 0, 0)),
        compiler_params=pltpu.CompilerParams(
            dimension_semantics=("parallel", "arbitrary")),
    )(logits3, labels3)

    # tiny epilogue: ece = sum_b |sum_{i in bin b}(conf_i - acc_i)| / N
    s_bin = jnp.sum(partials, axis=(0, 2))                # [n_bins_eff]
    ece = jnp.sum(jnp.abs(s_bin)) / jnp.float32(N)
    return ece.reshape(1)


if __name__ == "__main__":
    key = jax.random.PRNGKey(0)
    k1, k2 = jax.random.split(key)

    B, C, H, W = 2, 4, 16, 16
    logits = jax.random.normal(k1, (B, C, H, W), dtype=jnp.float32) * 2.0
    labels = jax.random.randint(k2, (B, H, W), 0, C, dtype=jnp.int32)

    ece = jax.block_until_ready(ece_loss(logits, labels))

    # pure-JAX reference replicating _ECELoss.forward semantics
    sm = jax.nn.softmax(logits, axis=1)
    conf = jnp.max(sm, axis=1).reshape(-1)
    pred = jnp.argmax(sm, axis=1).reshape(-1)
    acc = (pred == labels.reshape(-1)).astype(jnp.float32)
    bounds = jnp.linspace(0.0, 1.0, 16)
    ref = jnp.zeros((), jnp.float32)
    for k in range(15):
        in_bin = (conf > bounds[k]) & (conf <= bounds[k + 1])
        cnt = jnp.sum(in_bin.astype(jnp.float32))
        prop = cnt / conf.shape[0]
        acc_in = jnp.sum(jnp.where(in_bin, acc, 0.0)) / jnp.maximum(cnt, 1.0)
        conf_in = jnp.sum(jnp.where(in_bin, conf, 0.0)) / jnp.maximum(cnt, 1.0)
        ref = ref + jnp.where(cnt > 0, jnp.abs(conf_in - acc_in) * prop, 0.0)

    assert ece.shape == (1,)
    assert jnp.allclose(ece[0], ref, atol=1e-5, rtol=1e-4), (ece, ref)

    print("KERNEL_OK")
</pallas_src>

<mosaic_0001>
module attributes {stable_mosaic.version = 11 : i64} {
  func.func @_ece_partial_kernel(%arg0: i32, %arg1: i32, %arg2: memref<1x4x256xf32, #tpu.memory_space<vmem>>, %arg3: memref<1x1x256xi32, #tpu.memory_space<vmem>>, %arg4: memref<1x12x128xf32, #tpu.memory_space<vmem>>) attributes {dimension_semantics = [#tpu.dimension_semantics<parallel>, #tpu.dimension_semantics<arbitrary>], iteration_bounds = array<i64: 2, 1>, scalar_prefetch = 0 : i64, scratch_operands = 0 : i64, tpu.core_type = #tpu.core_type<tc>, window_params = [{transform_indices = @transform_0, window_bounds = array<i64: 1, 4, 256>}, {transform_indices = @transform_1, window_bounds = array<i64: 1, 1, 256>}, {transform_indices = @transform_2, window_bounds = array<i64: 1, 12, 128>}]} {
    %c0_i32 = arith.constant 0 : i32
    %0 = arith.cmpi eq, %arg1, %c0_i32 : i32
    %1 = arith.extui %0 : i1 to i32
    %c0_i32_0 = arith.constant 0 : i32
    %2 = arith.cmpi ne, %1, %c0_i32_0 : i32
    scf.if %2 {
      %cst_19 = arith.constant 0.000000e+00 : f32
      %61 = vector.broadcast %cst_19 : f32 to vector<1x12x128xf32>
      %c0_20 = arith.constant 0 : index
      %c0_21 = arith.constant 0 : index
      %c0_22 = arith.constant 0 : index
      %62 = vector.load %arg4[%c0_20, %c0_21, %c0_22] : memref<1x12x128xf32, #tpu.memory_space<vmem>>, vector<1x12x128xf32>
      tpu.vector_store %arg4[%c0_20, %c0_21, %c0_22], %61 {strides = array<i32>} : memref<1x12x128xf32, #tpu.memory_space<vmem>>, vector<1x12x128xf32>,
    } else {
    }
    %c0 = arith.constant 0 : index
    %c0_1 = arith.constant 0 : index
    %c0_2 = arith.constant 0 : index
    %3 = vector.load %arg2[%c0, %c0_1, %c0_2] : memref<1x4x256xf32, #tpu.memory_space<vmem>>, vector<1x4x256xf32>
    %4 = vector.shape_cast %3 : vector<1x4x256xf32> to vector<4x256xf32>
    %c0_3 = arith.constant 0 : index
    %c0_4 = arith.constant 0 : index
    %c0_5 = arith.constant 0 : index
    %5 = vector.load %arg3[%c0_3, %c0_4, %c0_5] : memref<1x1x256xi32, #tpu.memory_space<vmem>>, vector<1x1x256xi32>
    %6 = vector.shape_cast %5 : vector<1x1x256xi32> to vector<1x256xi32>
    %7 = arith.sitofp %6 : vector<1x256xi32> to vector<1x256xf32>
    %cst = arith.constant dense<0xFF800000> : vector<256xf32>
    %8 = vector.multi_reduction <maximumf>, %4, %cst [0] : vector<4x256xf32> to vector<256xf32>
    %9 = vector.shape_cast %8 : vector<256xf32> to vector<1x256xf32>
    %10 = vector.broadcast %9 : vector<1x256xf32> to vector<4x256xf32>
    %11 = arith.subf %4, %10 : vector<4x256xf32>
    %12 = math.exp %11 : vector<4x256xf32>
    %cst_6 = arith.constant dense<0.000000e+00> : vector<256xf32>
    %13 = vector.multi_reduction <add>, %12, %cst_6 [0] : vector<4x256xf32> to vector<256xf32>
    %14 = vector.shape_cast %13 : vector<256xf32> to vector<1x256xf32>
    %cst_7 = arith.constant 1.000000e+00 : f32
    %15 = vector.broadcast %cst_7 : f32 to vector<1x256xf32>
    %16 = arith.divf %15, %14 : vector<1x256xf32>
    %17 = tpu.iota {dimensions = array<i32: 0>} : vector<4x256xi32>
    %18 = arith.sitofp %17 : vector<4x256xi32> to vector<4x256xf32>
    %19 = vector.broadcast %9 : vector<1x256xf32> to vector<4x256xf32>
    %20 = arith.cmpf oeq, %4, %19 : vector<4x256xf32>
    %cst_8 = arith.constant 4.000000e+00 : f32
    %21 = vector.broadcast %cst_8 : f32 to vector<4x256xf32>
    %22 = arith.select %20, %18, %21 : vector<4x256xi1>, vector<4x256xf32>
    %cst_9 = arith.constant dense<0x7F800000> : vector<256xf32>
    %23 = vector.multi_reduction <minimumf>, %22, %cst_9 [0] : vector<4x256xf32> to vector<256xf32>
    %24 = vector.shape_cast %23 : vector<256xf32> to vector<1x256xf32>
    %25 = arith.cmpf oeq, %24, %7 : vector<1x256xf32>
    %26 = arith.extui %25 : vector<1x256xi1> to vector<1x256xi32>
    %27 = arith.sitofp %26 : vector<1x256xi32> to vector<1x256xf32>
    %28 = arith.subf %16, %27 : vector<1x256xf32>
    %cst_10 = arith.constant 1.500000e+01 : f32
    %29 = vector.broadcast %cst_10 : f32 to vector<1x256xf32>
    %30 = arith.mulf %16, %29 : vector<1x256xf32>
    %31 = math.ceil %30 : vector<1x256xf32>
    %32 = arith.fptosi %31 : vector<1x256xf32> to vector<1x256xi32>
    %c1_i32 = arith.constant 1 : i32
    %33 = vector.broadcast %c1_i32 : i32 to vector<1x256xi32>
    %34 = arith.subi %32, %33 : vector<1x256xi32>
    %35 = tpu.iota {dimensions = array<i32: 0>} : vector<12x1xi32>
    %c3_i32 = arith.constant 3 : i32
    %36 = vector.broadcast %c3_i32 : i32 to vector<12x1xi32>
    %37 = arith.addi %36, %35 : vector<12x1xi32>
    %38 = vector.extract_strided_slice %34 {offsets = [0, 0], sizes = [1, 128], strides = [1, 1]} : vector<1x256xi32> to vector<1x128xi32>
    %39 = vector.extract_strided_slice %28 {offsets = [0, 0], sizes = [1, 128], strides = [1, 1]} : vector<1x256xf32> to vector<1x128xf32>
    %40 = vector.broadcast %38 : vector<1x128xi32> to vector<12x128xi32>
    %41 = vector.broadcast %37 : vector<12x1xi32> to vector<12x128xi32>
    %42 = arith.cmpi eq, %40, %41 : vector<12x128xi32>
    %cst_11 = arith.constant 0.000000e+00 : f32
    %43 = vector.shape_cast %39 : vector<1x128xf32> to vector<1x128xf32>
    %44 = vector.broadcast %43 : vector<1x128xf32> to vector<12x128xf32>
    %45 = vector.broadcast %cst_11 : f32 to vector<12x128xf32>
    %46 = arith.select %42, %44, %45 : vector<12x128xi1>, vector<12x128xf32>
    %47 = vector.extract_strided_slice %34 {offsets = [0, 128], sizes = [1, 128], strides = [1, 1]} : vector<1x256xi32> to vector<1x128xi32>
    %48 = vector.extract_strided_slice %28 {offsets = [0, 128], sizes = [1, 128], strides = [1, 1]} : vector<1x256xf32> to vector<1x128xf32>
    %49 = vector.broadcast %47 : vector<1x128xi32> to vector<12x128xi32>
    %50 = vector.broadcast %37 : vector<12x1xi32> to vector<12x128xi32>
    %51 = arith.cmpi eq, %49, %50 : vector<12x128xi32>
    %cst_12 = arith.constant 0.000000e+00 : f32
    %52 = vector.shape_cast %48 : vector<1x128xf32> to vector<1x128xf32>
    %53 = vector.broadcast %52 : vector<1x128xf32> to vector<12x128xf32>
    %54 = vector.broadcast %cst_12 : f32 to vector<12x128xf32>
    %55 = arith.select %51, %53, %54 : vector<12x128xi1>, vector<12x128xf32>
    %56 = arith.addf %46, %55 : vector<12x128xf32>
    %c0_13 = arith.constant 0 : index
    %c0_14 = arith.constant 0 : index
    %c0_15 = arith.constant 0 : index
    %57 = vector.load %arg4[%c0_13, %c0_14, %c0_15] : memref<1x12x128xf32, #tpu.memory_space<vmem>>, vector<1x12x128xf32>
    %58 = vector.shape_cast %56 : vector<12x128xf32> to vector<1x12x128xf32>
    %59 = arith.addf %57, %58 : vector<1x12x128xf32>
    %c0_16 = arith.constant 0 : index
    %c0_17 = arith.constant 0 : index
    %c0_18 = arith.constant 0 : index
    %60 = vector.load %arg4[%c0_16, %c0_17, %c0_18] : memref<1x12x128xf32, #tpu.memory_space<vmem>>, vector<1x12x128xf32>
    tpu.vector_store %arg4[%c0_16, %c0_17, %c0_18], %59 {strides = array<i32>} : memref<1x12x128xf32, #tpu.memory_space<vmem>>, vector<1x12x128xf32>,
    return
  }
  func.func @transform_0(%arg0: i32, %arg1: i32) -> (i32, i32, i32) {
    %c0_i32 = arith.constant 0 : i32
    %c0_i32_0 = arith.constant 0 : i32
    return %arg0, %c0_i32, %arg1 : i32, i32, i32
  }
  func.func @transform_1(%arg0: i32, %arg1: i32) -> (i32, i32, i32) {
    %c0_i32 = arith.constant 0 : i32
    %c0_i32_0 = arith.constant 0 : i32
    return %arg0, %c0_i32, %arg1 : i32, i32, i32
  }
  func.func @transform_2(%arg0: i32, %arg1: i32) -> (i32, i32, i32) {
    %c0_i32 = arith.constant 0 : i32
    %c0_i32_0 = arith.constant 0 : i32
    %c0_i32_1 = arith.constant 0 : i32
    return %arg0, %c0_i32, %c0_i32_0 : i32, i32, i32
  }
}

</mosaic_0001>

<llo_original>
// kernel: tpu_custom_call.1
$region0: #{tpu_custom_call.1}
  #allocation0 [shape = 'u32[]', space=smem, size = 0x4, offset = 0x4, fixed_abs, tag = 'smem constant byte address 0x4 - core index']
  #allocation1 [shape = 'u32[144,128]{1,0:T(1,128)}', space=vmem, size = 0x12000, scoped, tag = 'internal scratch']
  %s0 = inlined_call_operand.hbm [shape: f32[2,4,256], index: 0, kind: input, shape index: {}]
  %s1 = inlined_call_operand.hbm [shape: s32[2,1,256], index: 1, kind: input, shape index: {}]
  %s2 = inlined_call_operand.vmem [shape: f32[2,12,128], index: 2, kind: output, shape index: {}]
  %s3 = sld [smem:[#allocation0]]
  $region53: #{tpu_custom_call.1} parent=0
    _
  %s5 = ssub.s32 1, %s3
  %s6 = scalar_select 0, %s5, %s3
  $region1: #{tpu_custom_call.1} parent=0
    #allocation2 [shape = 'u8[8192]{0}', space=vmem, size = 0x2000, scoped, tag = 'input window, operand 0']
    #allocation3 [shape = 's32[2]{0}', space=sflag, size = 0x8, scoped, tag = 'scoped memory for tpu_custom_call.1']
    #allocation4 [shape = 'u8[2048]{0}', space=vmem, size = 0x800, scoped, tag = 'input window, operand 1']
    #allocation5 [shape = 's32[2]{0}', space=sflag, size = 0x8, scoped, tag = 'scoped memory for tpu_custom_call.1']
    %7 = vsyncpa [#allocation3], 0
    %s8 = scalar_lea.sflag [#allocation3], 1
    %9 = vsyncpa %s8, 0
    %10 = vsyncpa [#allocation5], 0
    %s11 = scalar_lea.sflag [#allocation5], 1
    %12 = vsyncpa %s11, 0
    loop: start=0, step=1, limit=4
    $region2: #{tpu_custom_call.1} parent=1 // loop_pre_header
      _
    $region3: #{tpu_custom_call.1} parent=1 // loop_header
      %s14 = sphi 0, %s18
      %p15 = scmp.ge.s32.totalorder %s14, 4
      %s21 = sphi 0, %s33
      %s22 = sphi 0, %s29
      %s23 = sphi 0, %s21
      %s24 = sphi 0, %s22
      %s25 = sphi 0, %s23
      %s26 = sphi 0, %s24
      %s38 = sphi 0, %s40
      %s41 = sphi 0, %s38
      %s42 = sphi 0, %s41
      %s58 = sphi 0, %s42
      %s66 = sphi 0, %s68
      %s69 = sphi 0, %s66
      %s70 = sphi 0, %s69
      %s86 = sphi 0, %s70
      %s92 = sphi 0, %s94
      %s95 = sphi 0, %s92
      %s96 = sphi 0, %s95
      %s112 = sphi 0, %s96
    $region4: #{tpu_custom_call.1} parent=1 // loop_header_branch
      %17 = sbr.rel (%p15) target = $region8
    $region5: #{tpu_custom_call.1} parent=1 // loop_body
      %s19 = ssub.s32 %s14, 1
      %s20 = ssub.s32 %s14, 2
      %s27 = sadd.s32 1, %s22
      %p28 = scmp.ge.s32.totalorder %s27, 1
      %s29 = scalar_select %p28, 0, %s27
      %s30 = sadd.s32 1, %s21
      %s31 = scalar_select %p28, %s30, %s21
      %p32 = scmp.ge.s32.totalorder %s31, 2
      %s33 = scalar_select %p32, 0, %s31
      %s34 = ssub.s32 %s21, %s33
      %s35 = ssub.s32 %s22, %s29
      %s36 = sor.u32 %s34, %s35
      %p37 = scmp.eq.s32.totalorder %s36, 0
      %s39 = sadd.s32 %s38, 1
      %s40 = scalar_select %p37, %s38, %s39
      %p43 = pneg %p37
      %p44 = scmp.eq.s32.totalorder %s14, 1
      %p45 = por %p43, %p44
      %p46 = scmp.ne.s32.totalorder %s38, %s41
      %p47 = scmp.eq.s32.totalorder %s14, 0
      %p48 = por %p46, %p47
      %p49 = scmp.ne.s32.totalorder %s38, %s41
      %p50 = scmp.eq.s32.totalorder %s19, 1
      %p51 = por %p49, %p50
      %p52 = scmp.ne.s32.totalorder %s41, %s42
      %p53 = scmp.eq.s32.totalorder %s19, 0
      %p54 = por %p52, %p53
      %p55 = scmp.ne.s32.totalorder %s41, %s42
      %p56 = scmp.eq.s32.totalorder %s20, 1
      %p57 = por %p55, %p56
      %p59 = scmp.ne.s32.totalorder %s42, %s58
      %p60 = scmp.eq.s32.totalorder %s20, 0
      %p61 = por %p59, %p60
      %s62 = ssub.s32 %s21, %s33
      %s63 = ssub.s32 %s22, %s29
      %s64 = sor.u32 %s62, %s63
      %p65 = scmp.eq.s32.totalorder %s64, 0
      %s67 = sadd.s32 %s66, 1
      %s68 = scalar_select %p65, %s66, %s67
      %p71 = pneg %p65
      %p72 = scmp.eq.s32.totalorder %s14, 1
      %p73 = por %p71, %p72
      %p74 = scmp.ne.s32.totalorder %s66, %s69
      %p75 = scmp.eq.s32.totalorder %s14, 0
      %p76 = por %p74, %p75
      %p77 = scmp.ne.s32.totalorder %s66, %s69
      %p78 = scmp.eq.s32.totalorder %s19, 1
      %p79 = por %p77, %p78
      %p80 = scmp.ne.s32.totalorder %s69, %s70
      %p81 = scmp.eq.s32.totalorder %s19, 0
      %p82 = por %p80, %p81
      %p83 = scmp.ne.s32.totalorder %s69, %s70
      %p84 = scmp.eq.s32.totalorder %s20, 1
      %p85 = por %p83, %p84
      %p87 = scmp.ne.s32.totalorder %s70, %s86
      %p88 = scmp.eq.s32.totalorder %s20, 0
      %p89 = por %p87, %p88
      %s90 = ssub.s32 %s21, %s33
      %p91 = scmp.eq.s32.totalorder %s90, 0
      %s93 = sadd.s32 %s92, 1
      %s94 = scalar_select %p91, %s92, %s93
      %p97 = pneg %p91
      %p98 = scmp.eq.s32.totalorder %s14, 1
      %p99 = por %p97, %p98
      %p100 = scmp.ne.s32.totalorder %s92, %s95
      %p101 = scmp.eq.s32.totalorder %s14, 0
      %p102 = por %p100, %p101
      %p103 = scmp.ne.s32.totalorder %s92, %s95
      %p104 = scmp.eq.s32.totalorder %s19, 1
      %p105 = por %p103, %p104
      %p106 = scmp.ne.s32.totalorder %s95, %s96
      %p107 = scmp.eq.s32.totalorder %s19, 0
      %p108 = por %p106, %p107
      %p109 = scmp.ne.s32.totalorder %s95, %s96
      %p110 = scmp.eq.s32.totalorder %s20, 1
      %p111 = por %p109, %p110
      %p113 = scmp.ne.s32.totalorder %s96, %s112
      %p114 = scmp.eq.s32.totalorder %s20, 0
      %p115 = por %p113, %p114
      %p116 = scmp.le.s32.totalorder 1, %s14
      %p117 = scmp.lt.s32.totalorder %s14, 3
      %p118 = pnand %p116, %p117
      %p119 = pneg %p118
      // Predicated region
      $region9: #{tpu_custom_call.1} parent=5 // pred_check
        _
      $region10: #{tpu_custom_call.1} parent=5 // pred_check_branch
        %121 = sbr.rel (%p118) target = $region12
      $region11: #{tpu_custom_call.1} parent=5 // pred_region
        %s122 = ssub.s32 %s14, 1
      $region12: #{tpu_custom_call.1} parent=5 // pred_fallthru
        _
      %p123 = scmp.lt.s32.totalorder %s14, 2
      // Predicated region
      $region13: #{tpu_custom_call.1} parent=5 // pred_check
        %p124 = pneg %p123
      $region14: #{tpu_custom_call.1} parent=5 // pred_check_branch
        %126 = sbr.rel (%p124) target = $region16
      $region15: #{tpu_custom_call.1} parent=5 // pred_region
        // Predicated region
        $region17: #{tpu_custom_call.1} parent=15 // pred_check
          %p127 = pneg %p48
        $region18: #{tpu_custom_call.1} parent=15 // pred_check_branch
          %129 = sbr.rel (%p127) target = $region20
        $region19: #{tpu_custom_call.1} parent=15 // pred_region
          %s130 = sand.u32 %s38, 1
          %s131 = scalar_lea.sflag [#allocation3], %s130
          %s132 = sand.u32 %s38, 1
          %s133 = smul.addr %s132, 8
          %s134 = scalar_lea.vmem [#allocation2], %s133
          %s135 = smul.u32 2, %s22
          %s137 = ssub.s32 128, 128
          %138 = vsyncadd %s131, %s137
          %s139 = smul.addr %s21, 2
          %s140 = sadd.s32 %s135, %s139
          %s141 = smul.addr %s140, 64
          %s142 = scalar_lea.hbm %s0, %s141
          %s144 = sshll.u32 %s134, 4
          %s145 = int_to_ptr.vmem [resolvable:$true] %s144
          %147 = dma.hbm_to_vmem [thread:$0]  %s142, 128, %s145, %s131
        $region20: #{tpu_custom_call.1} parent=15 // pred_fallthru
          _
        // Predicated region
        $region21: #{tpu_custom_call.1} parent=15 // pred_check
          %p148 = pneg %p76
        $region22: #{tpu_custom_call.1} parent=15 // pred_check_branch
          %150 = sbr.rel (%p148) target = $region24
        $region23: #{tpu_custom_call.1} parent=15 // pred_region
          %s151 = sand.u32 %s66, 1
          %s152 = scalar_lea.sflag [#allocation5], %s151
          %s153 = sand.u32 %s66, 1
          %s154 = smul.addr %s153, 2
          %s155 = scalar_lea.vmem [#allocation4], %s154
          %s156 = smul.u32 2, %s22
          %s158 = ssub.s32 32, 32
          %159 = vsyncadd %s152, %s158
          %s160 = smul.addr %s21, 2
          %s161 = sadd.s32 %s156, %s160
          %s162 = smul.addr %s161, 16
          %s163 = scalar_lea.hbm %s1, %s162
          %s165 = sshll.u32 %s155, 4
          %s166 = int_to_ptr.vmem [resolvable:$true] %s165
          %168 = dma.hbm_to_vmem [thread:$0]  %s163, 32, %s166, %s152
        $region24: #{tpu_custom_call.1} parent=15 // pred_fallthru
          _
      $region16: #{tpu_custom_call.1} parent=5 // pred_fallthru
        _
      %p169 = scmp.le.s32.totalorder 1, %s14
      %p170 = scmp.lt.s32.totalorder %s14, 3
      %p171 = pnand %p169, %p170
      %p172 = pneg %p171
      // Predicated region
      $region25: #{tpu_custom_call.1} parent=5 // pred_check
        _
      $region26: #{tpu_custom_call.1} parent=5 // pred_check_branch
        %174 = sbr.rel (%p171) target = $region28
      $region27: #{tpu_custom_call.1} parent=5 // pred_region
        %s175 = ssub.s32 %s14, 1
        %s176 = sand.u32 %s41, 1
        %s177 = scalar_lea.sflag [#allocation3], %s176
        %s178 = sand.u32 %s41, 1
        %s179 = smul.addr %s178, 8
        %s180 = scalar_lea.vmem [#allocation2], %s179
        // Predicated region
        $region29: #{tpu_custom_call.1} parent=27 // pred_check
          %p181 = pneg %p54
        $region30: #{tpu_custom_call.1} parent=27 // pred_check_branch
          %183 = sbr.rel (%p181) target = $region32
        $region31: #{tpu_custom_call.1} parent=27 // pred_region
          %184 = dma.done %s177, 128
        $region32: #{tpu_custom_call.1} parent=27 // pred_fallthru
          _
        %s185 = sand.u32 %s69, 1
        %s186 = scalar_lea.sflag [#allocation5], %s185
        %s187 = sand.u32 %s69, 1
        %s188 = smul.addr %s187, 2
        %s189 = scalar_lea.vmem [#allocation4], %s188
        // Predicated region
        $region33: #{tpu_custom_call.1} parent=27 // pred_check
          %p190 = pneg %p82
        $region34: #{tpu_custom_call.1} parent=27 // pred_check_branch
          %192 = sbr.rel (%p190) target = $region36
        $region35: #{tpu_custom_call.1} parent=27 // pred_region
          %193 = dma.done %s186, 32
        $region36: #{tpu_custom_call.1} parent=27 // pred_fallthru
          _
        %s194 = sand.u32 %s41, 1
        %s195 = scalar_lea.sflag [#allocation3], %s194
        %s196 = sand.u32 %s41, 1
        %s197 = smul.addr %s196, 8
        %s198 = scalar_lea.vmem [#allocation2], %s197
        %p199 = pneg %p54
        %p200 = pneg %p51
        %s201 = sand.u32 %s69, 1
        %s202 = scalar_lea.sflag [#allocation5], %s201
        %s203 = sand.u32 %s69, 1
        %s204 = smul.addr %s203, 2
        %s205 = scalar_lea.vmem [#allocation4], %s204
        %p206 = pneg %p82
        %p207 = pneg %p79
        %p208 = pneg %p108
        %p209 = pneg %p105
        %p210 = scmp.lt.s32.totalorder %s23, 1
        %s211 = scalar_select %p210, %s23, 1
        %s212 = smul.addr %s211, 2
        %s213 = smul.addr %s212, 8
        %s214 = scalar_lea.vmem %s2, %s213
        %s215 = smul.u32 2, %s24
        %s216 = smul.u32 2, %s24
        %p217 = scmp.lt.s32.totalorder %s23, 1
        %s218 = scalar_select %p217, %s23, 1
        %s219 = smul.addr %s218, 2
        %s220 = smul.addr %s219, 8
        %s221 = scalar_lea.vmem %s2, %s220
        %p222 = scmp.eq.s32.totalorder %s24, 0
        // Predicated region
        $region37: #{tpu_custom_call.1} parent=27 // pred_check
          %p223 = pneg %p222
        $region38: #{tpu_custom_call.1} parent=27 // pred_check_branch
          %225 = sbr.rel (%p223) target = $region40
        $region39: #{tpu_custom_call.1} parent=27 // pred_region
          %226 = vst [vmem:[%s221] sm:$0xff] 0.0
          %227 = vst [vmem:[%s221 + $0x8] sm:$0xf] 0.0
        $region40: #{tpu_custom_call.1} parent=27 // pred_fallthru
          _
        %v228 = vld [vmem:[%s180] sm:$0xff]
        %v229 = vld [vmem:[%s189] sm:$0x3]
        %v230 = vcvt.s32.f32 %v229
        %v232 = vcombine.high %v228, %v228
        %vm234 = vcmask 1043456
        %v235 = vsel %vm234, %v228, -inf
        %v236 = vrot.slane %v235, 4
        %v237 = vmax.f32 %v235, %v236
        %v238 = vrot.slane %v237, 2
        %v239 = vmax.f32 %v237, %v238
        %v240 = vrot.slane %v239, 1
        %v241 = vmax.f32 %v239, %v240
        %v242 = vsel %vm234, %v232, -inf
        %v243 = vrot.slane %v242, 4
        %v244 = vmax.f32 %v242, %v243
        %v245 = vrot.slane %v244, 2
        %v246 = vmax.f32 %v244, %v245
        %v247 = vrot.slane %v246, 1
        %v248 = vmax.f32 %v246, %v247
        %v251 = vcombine.low %v241, %v248
        %v253 = vsub.f32 %v228, %v251
        %v254 = vmul.f32 %v253, 1.442695
        %v255 = vpow.pop %v254
        %v257 = vcombine.high %v255, %v255
        %v259 = vsel %vm234, %v255, 0.0
        %v260 = vrot.slane %v259, 4
        %v261 = vadd.f32 %v259, %v260
        %v262 = vrot.slane %v261, 2
        %v263 = vadd.f32 %v261, %v262
        %v264 = vrot.slane %v263, 1
        %v265 = vadd.f32 %v263, %v264
        %v266 = vsel %vm234, %v257, 0.0
        %v267 = vrot.slane %v266, 4
        %v268 = vadd.f32 %v266, %v267
        %v269 = vrot.slane %v268, 2
        %v270 = vadd.f32 %v268, %v269
        %v271 = vrot.slane %v270, 1
        %v272 = vadd.f32 %v270, %v271
        %v273 = vrcp.pop %v265
        %v274 = vmul.f32 1.0, %v273
        %v275 = vrcp.pop %v272
        %v276 = vmul.f32 1.0, %v275
        %v277 = vlaneseq
        %v278 = vshrl.u32 %v277, 7
        %v279 = vcvt.s32.f32 %v278
        %vm280 = vcmp.eq.f32.partialorder %v228, %v251
        %v283 = vunpack.c.l.s4 839922192
        %v284 = vunpack.c.0.s8 %v283
        %v285 = vlaneseq
        %v286 = vshrl.u32 %v285, 7
        %v287 = vsub.s32 %v284, %v286
        %v288 = vrot.slane %v279, %v287
        %v290 = vsel %vm280, %v288, 4.0
        %v292 = vcombine.high %v290, %v290
        %v294 = vsel %vm234, %v290, inf
        %v295 = vrot.slane %v294, 4
        %v296 = vmin.f32 %v294, %v295
        %v297 = vrot.slane %v296, 2
        %v298 = vmin.f32 %v296, %v297
        %v299 = vrot.slane %v298, 1
        %v300 = vmin.f32 %v298, %v299
        %v301 = vsel %vm234, %v292, inf
        %v302 = vrot.slane %v301, 4
        %v303 = vmin.f32 %v301, %v302
        %v304 = vrot.slane %v303, 2
        %v305 = vmin.f32 %v303, %v304
        %v306 = vrot.slane %v305, 1
        %v307 = vmin.f32 %v305, %v306
        %v309 = vlaneseq
        %v310 = vshrl.u32 %v309, 7
        %v311 = vsub.s32 0, %v310
        %v312 = vrot.slane %v230, %v311
        %v313 = vlaneseq
        %v314 = vshrl.u32 %v313, 7
        %v315 = vsub.s32 1, %v314
        %v316 = vrot.slane %v230, %v315
        %vm319 = vcmp.eq.f32.partialorder %v300, %v312
        %vm320 = vcmp.eq.f32.partialorder %v307, %v316
        %v321 = vsel %vm319, 1, 0
        %v322 = vsel %vm320, 1, 0
        %v323 = vcvt.s32.f32 %v321
        %v324 = vcvt.s32.f32 %v322
        %v325 = vsub.f32 %v274, %v323
        %v326 = vsub.f32 %v276, %v324
        %v327 = vmul.f32 %v274, 15.0
        %v328 = vmul.f32 %v276, 15.0
        %v329 = vceil.f32 %v327
        %v330 = vceil.f32 %v328
        %v331 = vcvt.f32.s32.to.zero.pseudo %v329
        %v332 = vcvt.f32.s32.to.zero.pseudo %v330
        %v333 = vsub.s32 %v331, 1
        %v334 = vsub.s32 %v332, 1
        %v335 = vadd.s32 %v278, 8
        %v336 = vadd.s32 %v278, 3
        %v337 = vadd.s32 %v335, 3
        %vm338 = vcmp.eq.s32.totalorder %v333, %v336
        %vm339 = vcmp.eq.s32.totalorder %v333, %v337
        %v340 = vlaneseq
        %v341 = vshrl.u32 %v340, 7
        %v342 = vsub.s32 0, %v341
        %v343 = vrot.slane %v325, %v342
        %v344 = vsel %vm338, %v343, 0.0
        %v345 = vsel %vm339, %v343, 0.0
        %vm346 = vcmp.eq.s32.totalorder %v334, %v336
        %vm347 = vcmp.eq.s32.totalorder %v334, %v337
        %v348 = vlaneseq
        %v349 = vshrl.u32 %v348, 7
        %v350 = vsub.s32 0, %v349
        %v351 = vrot.slane %v326, %v350
        %v352 = vsel %vm346, %v351, 0.0
        %v353 = vsel %vm347, %v351, 0.0
        %v354 = vadd.f32 %v344, %v352
        %v355 = vadd.f32 %v345, %v353
        %v356 = vld [vmem:[%s221] sm:$0xff]
        %v357 = vld [vmem:[%s221 + $0x8] sm:$0xf]
        %v358 = vadd.f32 %v356, %v354
        %v359 = vadd.f32 %v357, %v355
        %360 = vst [vmem:[%s221] sm:$0xff] %v358
        %361 = vst [vmem:[%s221 + $0x8] sm:$0xf] %v359
        %p362 = scmp.lt.s32.totalorder %s23, 1
        %s363 = scalar_select %p362, %s23, 1
        %s364 = smul.addr %s363, 2
        %s365 = smul.addr %s364, 8
        %s366 = scalar_lea.vmem %s2, %s365
        // Predicated region
        $region41: #{tpu_custom_call.1} parent=27 // pred_check
          %p367 = pneg %p105
        $region42: #{tpu_custom_call.1} parent=27 // pred_check_branch
          %369 = sbr.rel (%p367) target = $region44
        $region43: #{tpu_custom_call.1} parent=27 // pred_region
          _
        $region44: #{tpu_custom_call.1} parent=27 // pred_fallthru
          _
      $region28: #{tpu_custom_call.1} parent=5 // pred_fallthru
        _
      %p370 = scmp.le.s32.totalorder 2, %s14
      // Predicated region
      $region45: #{tpu_custom_call.1} parent=5 // pred_check
        %p371 = pneg %p370
      $region46: #{tpu_custom_call.1} parent=5 // pred_check_branch
        %373 = sbr.rel (%p371) target = $region48
      $region47: #{tpu_custom_call.1} parent=5 // pred_region
        %s374 = ssub.s32 %s14, 2
        // Predicated region
        $region49: #{tpu_custom_call.1} parent=47 // pred_check
          %p375 = pneg %p111
        $region50: #{tpu_custom_call.1} parent=47 // pred_check_branch
          %377 = sbr.rel (%p375) target = $region52
        $region51: #{tpu_custom_call.1} parent=47 // pred_region
          %p378 = scmp.lt.s32.totalorder %s25, 1
          %s379 = scalar_select %p378, %s25, 1
          %s380 = smul.addr %s379, 2
          %s381 = smul.addr %s380, 8
          %s382 = scalar_lea.vmem %s2, %s381
        $region52: #{tpu_custom_call.1} parent=47 // pred_fallthru
          _
      $region48: #{tpu_custom_call.1} parent=5 // pred_fallthru
        _
    $region6: #{tpu_custom_call.1} parent=1 // loop_footer
      %s18 = sadd.s32 1, %s14
    $region7: #{tpu_custom_call.1} parent=1 // loop_footer_branch
      %13 = sbr.rel target = $region3
    $region8: #{tpu_custom_call.1} parent=1 // loop_exit
      _
    %383 = vsyncpa [#allocation3], 1
    %s384 = scalar_lea.sflag [#allocation3], 1
    %385 = vsyncpa %s384, 1
    %386 = vsyncpa [#allocation5], 1
    %s387 = scalar_lea.sflag [#allocation5], 1
    %388 = vsyncpa %s387, 1

</llo_original>
